<compile_context>
chip_gen: v5e
topology: v5e:2x2
jax: 0.10.0
libtpu: 0.0.40
codegen_flags: <defaults>
</compile_context>

<pallas_src>
import jax
import jax.numpy as jnp
from jax.experimental import pallas as pl
from jax.experimental.pallas import tpu as pltpu


def _linear1x1_bias_kernel(w_ref, b_ref, x_ref, o_ref):
    """out = W @ x + b for one (batch, spatial-tile) block.

    w_ref : (C_out, C_in)   conv weight (untransposed)
    b_ref : (C_out, 1)      bias, f32
    x_ref : (C_in, THW)     spatial tile of one batch element (lane axis = HW)
    o_ref : (C_out, THW)    output tile
    """
    acc = jnp.dot(w_ref[...], x_ref[...], preferred_element_type=jnp.float32)
    o_ref[...] = (acc + b_ref[...]).astype(o_ref.dtype)


def _linear1x1_kernel(w_ref, x_ref, o_ref):
    """out = W @ x (no bias) for one (batch, spatial-tile) block."""
    o_ref[...] = jnp.dot(
        w_ref[...], x_ref[...], preferred_element_type=jnp.float32
    ).astype(o_ref.dtype)


def _choose_spatial_tile(hw, block_hw):
    """Largest lane-dense tile (multiple of 128) <= block_hw dividing hw.

    Falls back to the full spatial extent (always a legal block), so no
    padding / masked ragged blocks are ever needed.
    """
    if hw <= block_hw:
        return hw
    t = (block_hw // 128) * 128
    while t >= 128:
        if hw % t == 0:
            return t
        t -= 128
    return hw


def linear_1x1_forward(x, weight, bias=None, *, block_hw=512):
    """JAX/Pallas equivalent of `linear.forward` (Conv2d kernel_size=(1,1))."""
    B, C_in, H, W = x.shape
    C_out = weight.shape[0]
    HW = H * W

    # Free reshapes only (contiguous-dim merges); no transposes, no pads.
    xm = x.reshape(B, C_in, HW)
    w2 = weight.reshape(C_out, -1)  # (C_out, C_in), handles (C_out,C_in,1,1)

    thw = _choose_spatial_tile(HW, int(block_hw))
    grid = (B, HW // thw)

    itemsize = jnp.dtype(x.dtype).itemsize
    # Actual VMEM need: double-buffered x/out blocks + weight/bias copies.
    vmem_need = (
        2 * (C_in * thw + C_out * thw) * itemsize
        + 2 * C_out * C_in * jnp.dtype(w2.dtype).itemsize
        + 2 * C_out * 4
    )
    vmem_limit = int(min(max(vmem_need + (2 << 20), 8 << 20), 48 << 20))

    dsize = itemsize
    cost = pl.CostEstimate(
        flops=2 * B * HW * C_in * C_out,
        transcendentals=0,
        bytes_accessed=B * HW * (C_in + C_out) * dsize + C_in * C_out * dsize,
    )

    compiler_params = pltpu.CompilerParams(
        dimension_semantics=("parallel", "parallel"),
        vmem_limit_bytes=vmem_limit,
    )

    x_spec = pl.BlockSpec((None, C_in, thw), lambda b, j: (b, 0, j))
    o_spec = pl.BlockSpec((None, C_out, thw), lambda b, j: (b, 0, j))
    w_spec = pl.BlockSpec((C_out, C_in), lambda b, j: (0, 0))

    if bias is not None:
        b2 = bias.reshape(C_out, 1).astype(jnp.float32)  # keep bias in f32
        b_spec = pl.BlockSpec((C_out, 1), lambda b, j: (0, 0))
        out = pl.pallas_call(
            _linear1x1_bias_kernel,
            out_shape=jax.ShapeDtypeStruct((B, C_out, HW), x.dtype),
            grid=grid,
            in_specs=[w_spec, b_spec, x_spec],
            out_specs=o_spec,
            compiler_params=compiler_params,
            cost_estimate=cost,
        )(w2, b2, xm)
    else:
        out = pl.pallas_call(
            _linear1x1_kernel,
            out_shape=jax.ShapeDtypeStruct((B, C_out, HW), x.dtype),
            grid=grid,
            in_specs=[w_spec, x_spec],
            out_specs=o_spec,
            compiler_params=compiler_params,
            cost_estimate=cost,
        )(w2, xm)

    return out.reshape(B, C_out, H, W)  # free reshape


def _reference(x, weight, bias=None):
    """Pure-JAX reference mirroring torch.nn.Conv2d(kernel_size=(1,1))."""
    C_out = weight.shape[0]
    w2 = weight.reshape(C_out, -1)
    y = jnp.einsum(
        "oc,bchw->bohw", w2, x, preferred_element_type=jnp.float32
    )
    if bias is not None:
        y = y + bias.astype(jnp.float32)[None, :, None, None]
    return y.astype(x.dtype)


if __name__ == "__main__":
    # Small shapes consistent with the module: batch=2, c_in=4, c_out=8, 16x16 spatial.
    B, C_in, C_out, H, W = 2, 4, 8, 16, 16

    key = jax.random.PRNGKey(0)
    k1, k2, k3 = jax.random.split(key, 3)

    x = jax.random.normal(k1, (B, C_in, H, W), dtype=jnp.float32)
    # Conv2d-style init bounds (deterministic synthetic parameters).
    fan_in = C_in  # kernel is 1x1
    bound = 1.0 / (fan_in ** 0.5)
    weight = jax.random.uniform(
        k2, (C_out, C_in, 1, 1), minval=-bound, maxval=bound, dtype=jnp.float32
    )
    bias = jax.random.uniform(
        k3, (C_out,), minval=-bound, maxval=bound, dtype=jnp.float32
    )

    y = jax.block_until_ready(linear_1x1_forward(x, weight, bias, block_hw=512))
    ref = _reference(x, weight, bias)
    assert y.shape == (B, C_out, H, W)
    assert jnp.allclose(y, ref, atol=1e-5, rtol=1e-5)

    # Also exercise the no-bias path (ctor supports bias=False).
    y_nb = jax.block_until_ready(linear_1x1_forward(x, weight, None, block_hw=512))
    assert jnp.allclose(y_nb, _reference(x, weight, None), atol=1e-5, rtol=1e-5)

    print("KERNEL_OK")
</pallas_src>

<mosaic_0001>
module attributes {stable_mosaic.version = 11 : i64} {
  func.func @_linear1x1_bias_kernel(%arg0: i32, %arg1: i32, %arg2: memref<8x4xf32, #tpu.memory_space<vmem>>, %arg3: memref<8x1xf32, #tpu.memory_space<vmem>>, %arg4: memref<1x4x256xf32, #tpu.memory_space<vmem>>, %arg5: memref<1x8x256xf32, #tpu.memory_space<vmem>>) attributes {dimension_semantics = [#tpu.dimension_semantics<parallel>, #tpu.dimension_semantics<parallel>], iteration_bounds = array<i64: 2, 1>, scalar_prefetch = 0 : i64, scratch_operands = 0 : i64, tpu.core_type = #tpu.core_type<tc>, window_params = [{pipeline_mode = #tpu.pipeline_mode<synchronous>, transform_indices = @transform_0, window_bounds = array<i64: 8, 4>}, {pipeline_mode = #tpu.pipeline_mode<synchronous>, transform_indices = @transform_1, window_bounds = array<i64: 8, 1>}, {transform_indices = @transform_2, window_bounds = array<i64: 1, 4, 256>}, {transform_indices = @transform_3, window_bounds = array<i64: 1, 8, 256>}]} {
    %c0 = arith.constant 0 : index
    %c0_0 = arith.constant 0 : index
    %0 = vector.load %arg2[%c0, %c0_0] : memref<8x4xf32, #tpu.memory_space<vmem>>, vector<8x4xf32>
    %c0_1 = arith.constant 0 : index
    %c0_2 = arith.constant 0 : index
    %c0_3 = arith.constant 0 : index
    %1 = vector.load %arg4[%c0_1, %c0_2, %c0_3] : memref<1x4x256xf32, #tpu.memory_space<vmem>>, vector<1x4x256xf32>
    %2 = vector.shape_cast %1 : vector<1x4x256xf32> to vector<4x256xf32>
    %cst = arith.constant dense<0.000000e+00> : vector<8x256xf32>
    %3 = tpu.matmul %0, %2, %cst {dimension_numbers = #tpu.dot_dimension_numbers<[1], [0], [0], [1], [0, 0, 1, 1], [], []>} : vector<8x4xf32>, vector<4x256xf32>, vector<8x256xf32> -> vector<8x256xf32>
    %c0_4 = arith.constant 0 : index
    %c0_5 = arith.constant 0 : index
    %4 = vector.load %arg3[%c0_4, %c0_5] : memref<8x1xf32, #tpu.memory_space<vmem>>, vector<8x1xf32>
    %5 = vector.broadcast %4 : vector<8x1xf32> to vector<8x256xf32>
    %6 = arith.addf %3, %5 : vector<8x256xf32>
    %c0_6 = arith.constant 0 : index
    %c0_7 = arith.constant 0 : index
    %c0_8 = arith.constant 0 : index
    %7 = vector.load %arg5[%c0_6, %c0_7, %c0_8] : memref<1x8x256xf32, #tpu.memory_space<vmem>>, vector<1x8x256xf32>
    %8 = vector.shape_cast %7 : vector<1x8x256xf32> to vector<8x256xf32>
    %9 = vector.shape_cast %6 : vector<8x256xf32> to vector<1x8x256xf32>
    tpu.vector_store %arg5[%c0_6, %c0_7, %c0_8], %9 {strides = array<i32>} : memref<1x8x256xf32, #tpu.memory_space<vmem>>, vector<1x8x256xf32>,
    return
  }
  func.func @transform_0(%arg0: i32, %arg1: i32) -> (i32, i32) {
    %c0_i32 = arith.constant 0 : i32
    %c0_i32_0 = arith.constant 0 : i32
    %c0_i32_1 = arith.constant 0 : i32
    return %c0_i32, %c0_i32_0 : i32, i32
  }
  func.func @transform_1(%arg0: i32, %arg1: i32) -> (i32, i32) {
    %c0_i32 = arith.constant 0 : i32
    %c0_i32_0 = arith.constant 0 : i32
    %c0_i32_1 = arith.constant 0 : i32
    return %c0_i32, %c0_i32_0 : i32, i32
  }
  func.func @transform_2(%arg0: i32, %arg1: i32) -> (i32, i32, i32) {
    %c0_i32 = arith.constant 0 : i32
    %c0_i32_0 = arith.constant 0 : i32
    return %arg0, %c0_i32, %arg1 : i32, i32, i32
  }
  func.func @transform_3(%arg0: i32, %arg1: i32) -> (i32, i32, i32) {
    %c0_i32 = arith.constant 0 : i32
    %c0_i32_0 = arith.constant 0 : i32
    return %arg0, %c0_i32, %arg1 : i32, i32, i32
  }
}

</mosaic_0001>

<llo_original>
// kernel: tpu_custom_call.1
$region0: #{tpu_custom_call.1}
  #allocation0 [shape = 'u32[]', space=smem, size = 0x4, offset = 0x4, fixed_abs, tag = 'smem constant byte address 0x4 - core index']
  #allocation1 [shape = 'u32[72,128]{1,0:T(1,128)}', space=vmem, size = 0x9000, scoped, tag = 'internal scratch']
  %s0 = inlined_call_operand.vmem [shape: f32[8,4], index: 0, kind: input, shape index: {}]
  %s1 = inlined_call_operand.vmem [shape: f32[8,1], index: 1, kind: input, shape index: {}]
  %s2 = inlined_call_operand.vmem [shape: f32[2,4,256], index: 2, kind: input, shape index: {}]
  %s3 = inlined_call_operand.hbm [shape: f32[2,8,256], index: 3, kind: output, shape index: {}]
  %s4 = sld [smem:[#allocation0]]
  $region45: #{tpu_custom_call.1} parent=0
    _
  %s6 = ssub.s32 1, %s4
  %s7 = scalar_select 0, %s6, %s4
  $region1: #{tpu_custom_call.1} parent=0
    #allocation2 [shape = 'u8[16384]{0}', space=vmem, size = 0x4000, scoped, tag = 'output window, operand 0']
    #allocation3 [shape = 's32[2]{0}', space=sflag, size = 0x8, scoped, tag = 'scoped memory for tpu_custom_call.1']
    %8 = vsyncpa [#allocation3], 0
    %s9 = scalar_lea.sflag [#allocation3], 1
    %10 = vsyncpa %s9, 0
    loop: start=0, step=1, limit=4
    $region2: #{tpu_custom_call.1} parent=1 // loop_pre_header
      _
    $region3: #{tpu_custom_call.1} parent=1 // loop_header
      %s12 = sphi 0, %s16
      %p13 = scmp.ge.s32.totalorder %s12, 4
      %s19 = sphi 0, %s31
      %s20 = sphi 0, %s27
      %s21 = sphi 0, %s19
      %s22 = sphi 0, %s20
      %s23 = sphi 0, %s21
      %s24 = sphi 0, %s22
      %s32 = sphi 0, %s32
      %s34 = sphi 0, %s32
      %s35 = sphi 0, %s34
      %s49 = sphi 0, %s35
      %s53 = sphi 0, %s53
      %s55 = sphi 0, %s53
      %s56 = sphi 0, %s55
      %s70 = sphi 0, %s56
      %s78 = sphi 0, %s80
      %s81 = sphi 0, %s78
      %s82 = sphi 0, %s81
      %s98 = sphi 0, %s82
      %s106 = sphi 0, %s108
      %s109 = sphi 0, %s106
      %s110 = sphi 0, %s109
      %s126 = sphi 0, %s110
    $region4: #{tpu_custom_call.1} parent=1 // loop_header_branch
      %15 = sbr.rel (%p13) target = $region8
    $region5: #{tpu_custom_call.1} parent=1 // loop_body
      %s17 = ssub.s32 %s12, 1
      %s18 = ssub.s32 %s12, 2
      %s25 = sadd.s32 1, %s20
      %p26 = scmp.ge.s32.totalorder %s25, 1
      %s27 = scalar_select %p26, 0, %s25
      %s28 = sadd.s32 1, %s19
      %s29 = scalar_select %p26, %s28, %s19
      %p30 = scmp.ge.s32.totalorder %s29, 2
      %s31 = scalar_select %p30, 0, %s29
      %s33 = sadd.s32 %s32, 1
      %p36 = scmp.eq.s32.totalorder %s12, 1
      %p37 = scmp.ne.s32.totalorder %s32, %s34
      %p38 = scmp.eq.s32.totalorder %s12, 0
      %p39 = por %p37, %p38
      %p40 = scmp.ne.s32.totalorder %s32, %s34
      %p41 = scmp.eq.s32.totalorder %s17, 1
      %p42 = por %p40, %p41
      %p43 = scmp.ne.s32.totalorder %s34, %s35
      %p44 = scmp.eq.s32.totalorder %s17, 0
      %p45 = por %p43, %p44
      %p46 = scmp.ne.s32.totalorder %s34, %s35
      %p47 = scmp.eq.s32.totalorder %s18, 1
      %p48 = por %p46, %p47
      %p50 = scmp.ne.s32.totalorder %s35, %s49
      %p51 = scmp.eq.s32.totalorder %s18, 0
      %p52 = por %p50, %p51
      %s54 = sadd.s32 %s53, 1
      %p57 = scmp.eq.s32.totalorder %s12, 1
      %p58 = scmp.ne.s32.totalorder %s53, %s55
      %p59 = scmp.eq.s32.totalorder %s12, 0
      %p60 = por %p58, %p59
      %p61 = scmp.ne.s32.totalorder %s53, %s55
      %p62 = scmp.eq.s32.totalorder %s17, 1
      %p63 = por %p61, %p62
      %p64 = scmp.ne.s32.totalorder %s55, %s56
      %p65 = scmp.eq.s32.totalorder %s17, 0
      %p66 = por %p64, %p65
      %p67 = scmp.ne.s32.totalorder %s55, %s56
      %p68 = scmp.eq.s32.totalorder %s18, 1
      %p69 = por %p67, %p68
      %p71 = scmp.ne.s32.totalorder %s56, %s70
      %p72 = scmp.eq.s32.totalorder %s18, 0
      %p73 = por %p71, %p72
      %s74 = ssub.s32 %s19, %s31
      %s75 = ssub.s32 %s20, %s27
      %s76 = sor.u32 %s74, %s75
      %p77 = scmp.eq.s32.totalorder %s76, 0
      %s79 = sadd.s32 %s78, 1
      %s80 = scalar_select %p77, %s78, %s79
      %p83 = pneg %p77
      %p84 = scmp.eq.s32.totalorder %s12, 1
      %p85 = por %p83, %p84
      %p86 = scmp.ne.s32.totalorder %s78, %s81
      %p87 = scmp.eq.s32.totalorder %s12, 0
      %p88 = por %p86, %p87
      %p89 = scmp.ne.s32.totalorder %s78, %s81
      %p90 = scmp.eq.s32.totalorder %s17, 1
      %p91 = por %p89, %p90
      %p92 = scmp.ne.s32.totalorder %s81, %s82
      %p93 = scmp.eq.s32.totalorder %s17, 0
      %p94 = por %p92, %p93
      %p95 = scmp.ne.s32.totalorder %s81, %s82
      %p96 = scmp.eq.s32.totalorder %s18, 1
      %p97 = por %p95, %p96
      %p99 = scmp.ne.s32.totalorder %s82, %s98
      %p100 = scmp.eq.s32.totalorder %s18, 0
      %p101 = por %p99, %p100
      %s102 = ssub.s32 %s19, %s31
      %s103 = ssub.s32 %s20, %s27
      %s104 = sor.u32 %s102, %s103
      %p105 = scmp.eq.s32.totalorder %s104, 0
      %s107 = sadd.s32 %s106, 1
      %s108 = scalar_select %p105, %s106, %s107
      %p111 = pneg %p105
      %p112 = scmp.eq.s32.totalorder %s12, 1
      %p113 = por %p111, %p112
      %p114 = scmp.ne.s32.totalorder %s106, %s109
      %p115 = scmp.eq.s32.totalorder %s12, 0
      %p116 = por %p114, %p115
      %p117 = scmp.ne.s32.totalorder %s106, %s109
      %p118 = scmp.eq.s32.totalorder %s17, 1
      %p119 = por %p117, %p118
      %p120 = scmp.ne.s32.totalorder %s109, %s110
      %p121 = scmp.eq.s32.totalorder %s17, 0
      %p122 = por %p120, %p121
      %p123 = scmp.ne.s32.totalorder %s109, %s110
      %p124 = scmp.eq.s32.totalorder %s18, 1
      %p125 = por %p123, %p124
      %p127 = scmp.ne.s32.totalorder %s110, %s126
      %p128 = scmp.eq.s32.totalorder %s18, 0
      %p129 = por %p127, %p128
      %p130 = scmp.le.s32.totalorder 1, %s12
      %p131 = scmp.lt.s32.totalorder %s12, 3
      %p132 = pnand %p130, %p131
      %p133 = pneg %p132
      // Predicated region
      $region9: #{tpu_custom_call.1} parent=5 // pred_check
        _
      $region10: #{tpu_custom_call.1} parent=5 // pred_check_branch
        %135 = sbr.rel (%p132) target = $region12
      $region11: #{tpu_custom_call.1} parent=5 // pred_region
        %s136 = ssub.s32 %s12, 1
        // Predicated region
        $region13: #{tpu_custom_call.1} parent=11 // pred_check
          %p137 = pneg %p45
        $region14: #{tpu_custom_call.1} parent=11 // pred_check_branch
          %139 = sbr.rel (%p137) target = $region16
        $region15: #{tpu_custom_call.1} parent=11 // pred_region
          _
        $region16: #{tpu_custom_call.1} parent=11 // pred_fallthru
          _
        // Predicated region
        $region17: #{tpu_custom_call.1} parent=11 // pred_check
          %p140 = pneg %p66
        $region18: #{tpu_custom_call.1} parent=11 // pred_check_branch
          %142 = sbr.rel (%p140) target = $region20
        $region19: #{tpu_custom_call.1} parent=11 // pred_region
          _
        $region20: #{tpu_custom_call.1} parent=11 // pred_fallthru
          _
      $region12: #{tpu_custom_call.1} parent=5 // pred_fallthru
        _
      %p143 = scmp.lt.s32.totalorder %s12, 2
      // Predicated region
      $region21: #{tpu_custom_call.1} parent=5 // pred_check
        %p144 = pneg %p143
      $region22: #{tpu_custom_call.1} parent=5 // pred_check_branch
        %146 = sbr.rel (%p144) target = $region24
      $region23: #{tpu_custom_call.1} parent=5 // pred_region
        // Predicated region
        $region25: #{tpu_custom_call.1} parent=23 // pred_check
          %p147 = pneg %p88
        $region26: #{tpu_custom_call.1} parent=23 // pred_check_branch
          %149 = sbr.rel (%p147) target = $region28
        $region27: #{tpu_custom_call.1} parent=23 // pred_region
          %s150 = smul.u32 2, %s20
          %p151 = scmp.lt.s32.totalorder %s19, 1
          %s152 = scalar_select %p151, %s19, 1
          %p153 = scmp.lt.s32.totalorder %s150, 1
          %s154 = scalar_select %p153, %s150, 1
          %s155 = smul.addr %s152, 2
          %s156 = sadd.s32 %s154, %s155
          %s157 = smul.addr %s156, 4
          %s158 = scalar_lea.vmem %s2, %s157
          %s159 = smul.u32 2, %s20
        $region28: #{tpu_custom_call.1} parent=23 // pred_fallthru
          _
      $region24: #{tpu_custom_call.1} parent=5 // pred_fallthru
        _
      %p160 = scmp.le.s32.totalorder 1, %s12
      %p161 = scmp.lt.s32.totalorder %s12, 3
      %p162 = pnand %p160, %p161
      %p163 = pneg %p162
      // Predicated region
      $region29: #{tpu_custom_call.1} parent=5 // pred_check
        _
      $region30: #{tpu_custom_call.1} parent=5 // pred_check_branch
        %165 = sbr.rel (%p162) target = $region32
      $region31: #{tpu_custom_call.1} parent=5 // pred_region
        %s166 = ssub.s32 %s12, 1
        %p167 = pneg %p45
        %p168 = pneg %p42
        %p169 = pneg %p66
        %p170 = pneg %p63
        %s171 = smul.u32 2, %s22
        %p172 = scmp.lt.s32.totalorder %s21, 1
        %s173 = scalar_select %p172, %s21, 1
        %p174 = scmp.lt.s32.totalorder %s171, 1
        %s175 = scalar_select %p174, %s171, 1
        %s176 = smul.addr %s173, 2
        %s177 = sadd.s32 %s175, %s176
        %s178 = smul.addr %s177, 4
        %s179 = scalar_lea.vmem %s2, %s178
        %p180 = pneg %p94
        %p181 = pneg %p91
        %p182 = pneg %p122
        %p183 = pneg %p119
        %s184 = sand.u32 %s109, 1
        %s185 = scalar_lea.sflag [#allocation3], %s184
        %s186 = sand.u32 %s109, 1
        %s187 = smul.addr %s186, 16
        %s188 = scalar_lea.vmem [#allocation2], %s187
        %s189 = smul.u32 2, %s22
        %p190 = scmp.lt.s32.totalorder %s21, 1
        %s191 = scalar_select %p190, %s21, 1
        %p192 = scmp.lt.s32.totalorder %s189, 1
        %s193 = scalar_select %p192, %s189, 1
        %s194 = smul.addr %s191, 2
        %s195 = sadd.s32 %s193, %s194
        %s196 = smul.addr %s195, 4
        %s197 = scalar_lea.vmem %s2, %s196
        %s198 = smul.u32 2, %s22
        %s199 = smul.u32 2, %s22
        %v200 = vld [vmem:[%s0] sm:$0xff]
        %v201 = vld [vmem:[%s197] sm:$0xff]
        %v202 = vld [vmem:[%s1] sm:$0xff]
        %204 = vset.pattern.permute.xlu0 0
        %205 = vperm.xlu0 %204, %v202
        %v206 = vpop.permute.xlu0 %205
        %209 = vst [vmem:[#allocation1] ss:$2 sm:$0xff] %v201
        %v210 = vld.sshfl [vmem:[#allocation1] sm:$0xff pattern:$0x75316420]
        %v211 = vld.sshfl [vmem:[#allocation1 + $0x8] sm:$0xff pattern:$0x75316420]
        %vm212 = vcmask 31744
        %v214 = vsel %vm212, %v200, 0
        %vm216 = vcmask 1043456
        %v217 = vsel %vm216, %v210, 0
        %v219 = vsel %vm216, %v211, 0
        %221 = vmatpush.msra.mxu0 0.0
        %222 = vmatpush.msra.mxu0 0.0
        %223 = vmatpush.msra.mxu0 0.0
        %224 = vmatpush.msra.mxu0 0.0
        %225 = vmatpush.msra.mxu0 0.0
        %226 = vmatpush.msra.mxu0 0.0
        %227 = vmatpush.msra.mxu0 0.0
        %228 = vmatpush.msra.mxu0 0.0
        %229 = vmatpush.msra.mxu0 0.0
        %230 = vmatpush.msra.mxu0 0.0
        %231 = vmatpush.msra.mxu0 0.0
        %232 = vmatpush.msra.mxu0 0.0
        %233 = vmatpush.msra.mxu0 0.0
        %234 = vmatpush.msra.mxu0 0.0
        %235 = vmatpush.msra.mxu0 0.0
        %236 = vmatpush.msra.mxu0 %v217
        %237 = vmatmul.f32.gmra.mxu0 %v214
        %v238 = vpop.f32.mrf.mxu0
        %v239 = vadd.f32 %v206, %v238
        %240 = vdwg.mxu0
        %241 = vmatpush.msra.mxu0 0.0
        %242 = vmatpush.msra.mxu0 0.0
        %243 = vmatpush.msra.mxu0 0.0
        %244 = vmatpush.msra.mxu0 0.0
        %245 = vmatpush.msra.mxu0 0.0
        %246 = vmatpush.msra.mxu0 0.0
        %247 = vmatpush.msra.mxu0 0.0
        %248 = vmatpush.msra.mxu0 0.0
        %249 = vmatpush.msra.mxu0 0.0
        %250 = vmatpush.msra.mxu0 0.0
        %251 = vmatpush.msra.mxu0 0.0
        %252 = vmatpush.msra.mxu0 0.0
        %253 = vmatpush.msra.mxu0 0.0
        %254 = vmatpush.msra.mxu0 0.0
        %255 = vmatpush.msra.mxu0 0.0
        %256 = vmatpush.msra.mxu0 %v219
        %257 = vmatmul.f32.gmra.mxu0 %v214
        %v258 = vpop.f32.mrf.mxu0
        %v259 = vadd.f32 %v206, %v258
        %260 = vdwg.mxu0
        %261 = vst [vmem:[%s188] sm:$0xff] %v239
        %262 = vst [vmem:[%s188 + $0x8] sm:$0xff] %v259
        %s263 = sand.u32 %s109, 1
        %s264 = scalar_lea.sflag [#allocation3], %s263
        %s265 = sand.u32 %s109, 1
        %s266 = smul.addr %s265, 16
        %s267 = scalar_lea.vmem [#allocation2], %s266
        // Predicated region
        $region33: #{tpu_custom_call.1} parent=31 // pred_check
          %p268 = pneg %p119
        $region34: #{tpu_custom_call.1} parent=31 // pred_check_branch
          %270 = sbr.rel (%p268) target = $region36
        $region35: #{tpu_custom_call.1} parent=31 // pred_region
          %s271 = smul.u32 2, %s22
          %273 = vsyncadd %s264, 0
          %s274 = smul.addr %s21, 2
          %s275 = sadd.s32 %s271, %s274
          %s276 = smul.addr %s275, 8
          %s277 = scalar_lea.hbm %s3, %s276
          %s279 = sshll.u32 %s267, 4
          %s280 = int_to_ptr.vmem [resolvable:$true] %s279
          %s281 = sshll.u32 %s277, 4
          %s282 = int_to_ptr.hbm [resolvable:$true] %s281
          %284 = dma.vmem_to_hbm [thread:$0]  %s280, 256, %s282, %s264
        $region36: #{tpu_custom_call.1} parent=31 // pred_fallthru
          _
      $region32: #{tpu_custom_call.1} parent=5 // pred_fallthru
        _
      %p285 = scmp.le.s32.totalorder 2, %s12
      // Predicated region
      $region37: #{tpu_custom_call.1} parent=5 // pred_check
        %p286 = pneg %p285
      $region38: #{tpu_custom_call.1} parent=5 // pred_check_branch
        %288 = sbr.rel (%p286) target = $region40
      $region39: #{tpu_custom_call.1} parent=5 // pred_region
        %s289 = ssub.s32 %s12, 2
        // Predicated region
        $region41: #{tpu_custom_call.1} parent=39 // pred_check
          %p290 = pneg %p125
        $region42: #{tpu_custom_call.1} parent=39 // pred_check_branch
          %292 = sbr.rel (%p290) target = $region44
        $region43: #{tpu_custom_call.1} parent=39 // pred_region
          %s293 = sand.u32 %s110, 1
          %s294 = scalar_lea.sflag [#allocation3], %s293
          %s295 = sand.u32 %s110, 1
          %s296 = smul.addr %s295, 16
          %s297 = scalar_lea.vmem [#allocation2], %s296
          %299 = dma.done %s294, 256
        $region44: #{tpu_custom_call.1} parent=39 // pred_fallthru
          _
      $region40: #{tpu_custom_call.1} parent=5 // pred_fallthru
        _
    $region6: #{tpu_custom_call.1} parent=1 // loop_footer
      %s16 = sadd.s32 1, %s12
    $region7: #{tpu_custom_call.1} parent=1 // loop_footer_branch
      %11 = sbr.rel target = $region3
    $region8: #{tpu_custom_call.1} parent=1 // loop_exit
      _
    %300 = vsyncpa [#allocation3], 1
    %s301 = scalar_lea.sflag [#allocation3], 1
    %302 = vsyncpa %s301, 1

</llo_original>
